<compile_context>
chip_gen: v7x
topology: tpu7x:2x2x1
jax: 0.10.0
libtpu: 0.0.40
codegen_flags: <defaults>
</compile_context>

<pallas_src>
import functools
import math

import jax
import jax.numpy as jnp
from jax.experimental import pallas as pl
from jax.experimental.pallas import tpu as pltpu

_LANE = 128
_EPS = 1e-5
_SLOPE = 0.2


def _round_up(n, m):
    return ((n + m - 1) // m) * m


def _decoder_kernel(x_ref, gamma_ref, beta_ref, w_ref, bias_ref, out_ref, h_ref,
                    *, n_layers, eps, slope, out_dim):
    """One grid step == one [BN -> Linear -> (LeakyReLU)] block.

    x_ref:     (B, fmax)        f32, resident (constant index map)
    gamma_ref: (1, 1, fmax)     f32, this layer's BN scale (0 in padded cols)
    beta_ref:  (1, 1, fmax)     f32, this layer's BN shift (0 in padded cols)
    w_ref:     (1, fmax, fmax)  bf16, this layer's weight (streams, double-buffered)
    bias_ref:  (1, 1, fmax)     f32, this layer's bias (0 in padded cols)
    out_ref:   (B, out_dim)     f32, written only on the last layer
    h_ref:     (B, fmax)        f32 VMEM scratch carrying activations across layers
    """
    l = pl.program_id(0)

    @pl.when(l == 0)
    def _():
        h_ref[...] = x_ref[...].astype(jnp.float32)

    h = h_ref[...]
    gamma = gamma_ref[0]
    beta = beta_ref[0]
    bias = bias_ref[0]

    # BatchNorm1d, training mode: batch mean + biased batch variance, folded with
    # the affine params into one scale/shift. Stats kept in f32 (exactness; v5e
    # has no bf16 VPU path so bf16 elementwise would only add converts).
    mean = jnp.mean(h, axis=0, keepdims=True)
    diff = h - mean
    var = jnp.mean(diff * diff, axis=0, keepdims=True)
    scale = gamma * jax.lax.rsqrt(var + eps)
    shift = beta - mean * scale
    xn = h * scale + shift

    # Linear on the MXU: bf16 operands, f32 accumulation.
    y = jnp.dot(xn.astype(jnp.bfloat16), w_ref[0],
                preferred_element_type=jnp.float32) + bias

    @pl.when(l < n_layers - 1)
    def _():
        # LeakyReLU(slope): max(y, slope*y) is equivalent only for 0 <= slope < 1.
        h_ref[...] = jnp.maximum(y, slope * y)

    @pl.when(l == n_layers - 1)
    def _():
        # Unpadded store (masked vst on the lane dim) - avoids 8x write
        # amplification on the narrow final layer and a wrapper slice copy.
        out_ref[...] = y[:, :out_dim].astype(out_ref.dtype)


def init_decoder_params(key, in_dim, latent_dim, out_dim):
    """PyTorch-default-style init, stored stacked & zero-padded to (fmax, fmax).

    Linear:      U(-1/sqrt(fan_in), 1/sqrt(fan_in)) for weight and bias.
    BatchNorm1d: gamma=1, beta=0 on real columns.
    Padded cols: gamma=0, beta=0, W=0, bias=0 (zero-propagation invariant).
    Weights are stored bf16 (MXU operand dtype); everything else f32.
    """
    dims = [int(in_dim)] + [int(d) for d in latent_dim] + [int(out_dim)]
    n_layers = len(dims) - 1
    fmax = _round_up(max(dims), _LANE)

    gamma = jnp.zeros((n_layers, 1, fmax), jnp.float32)
    beta = jnp.zeros((n_layers, 1, fmax), jnp.float32)
    w = jnp.zeros((n_layers, fmax, fmax), jnp.float32)
    bias = jnp.zeros((n_layers, 1, fmax), jnp.float32)

    for i in range(n_layers):
        fin, fout = dims[i], dims[i + 1]
        key, kw, kb = jax.random.split(key, 3)
        bound = 1.0 / math.sqrt(fin)
        w_i = jax.random.uniform(kw, (fin, fout), jnp.float32, -bound, bound)
        b_i = jax.random.uniform(kb, (fout,), jnp.float32, -bound, bound)
        w = w.at[i, :fin, :fout].set(w_i)
        bias = bias.at[i, 0, :fout].set(b_i)
        gamma = gamma.at[i, 0, :fin].set(1.0)
        # beta stays 0 (real cols: PyTorch default; padded cols: required 0).

    return {
        "dims": dims,
        "fmax": fmax,
        "gamma": gamma,
        "beta": beta,
        "w": w.astype(jnp.bfloat16),   # bf16 MXU operands; reference reuses these
        "bias": bias,
    }


def _vmem_limit_bytes(batch, fmax, out_dim):
    resident = 2 * batch * fmax * 4 + batch * out_dim * 4      # x + h scratch + out
    streamed = 2 * (fmax * fmax * 2 + 3 * fmax * 4)            # 2x-buffered W/gamma/beta/bias
    need = resident + streamed
    try:
        cap = int(getattr(pltpu.get_tpu_info(), "vmem_capacity_bytes",
                          64 * 1024 * 1024))
    except Exception:   # conservative fallback = v7x's 64 MiB per TensorCore
        cap = 64 * 1024 * 1024
    # Never below the known-good 32 MiB floor for tiny problems, never above ~80%
    # of this generation's physical VMEM (headroom for compiler-internal scratch).
    return int(min(0.8 * cap, max(32 * 1024 * 1024, 2 * need)))


def decoder_forward(x, params):
    """Runs the whole decoder in one pallas_call; returns (B, out_dim) f32."""
    dims = params["dims"]
    fmax = params["fmax"]
    n_layers = len(dims) - 1
    out_dim = dims[-1]

    batch, fin = x.shape
    assert fin == dims[0], (fin, dims[0])
    x = x.astype(jnp.float32)
    if fin < fmax:
        x = jnp.pad(x, ((0, 0), (0, fmax - fin)))   # padded cols are exact zeros

    gamma, beta, w, bias = params["gamma"], params["beta"], params["w"], params["bias"]

    kernel = functools.partial(_decoder_kernel, n_layers=n_layers, eps=_EPS,
                               slope=_SLOPE, out_dim=out_dim)

    cost = pl.CostEstimate(
        flops=2 * batch * fmax * fmax * n_layers,
        transcendentals=n_layers * fmax,               # one rsqrt per BN column
        bytes_accessed=(x.nbytes + gamma.nbytes + beta.nbytes + w.nbytes
                        + bias.nbytes + batch * out_dim * 4),
    )

    grid_spec = pltpu.PrefetchScalarGridSpec(
        num_scalar_prefetch=0,
        grid=(n_layers,),
        in_specs=[
            pl.BlockSpec((batch, fmax), lambda l: (0, 0)),        # x (resident)
            pl.BlockSpec((1, 1, fmax), lambda l: (l, 0, 0)),      # gamma_l
            pl.BlockSpec((1, 1, fmax), lambda l: (l, 0, 0)),      # beta_l
            pl.BlockSpec((1, fmax, fmax), lambda l: (l, 0, 0)),   # W_l (streams)
            pl.BlockSpec((1, 1, fmax), lambda l: (l, 0, 0)),      # bias_l
        ],
        out_specs=pl.BlockSpec((batch, out_dim), lambda l: (0, 0)),
        scratch_shapes=[pltpu.VMEM((batch, fmax), jnp.float32)],  # activation carry
    )

    return pl.pallas_call(
        kernel,
        out_shape=jax.ShapeDtypeStruct((batch, out_dim), jnp.float32),
        grid_spec=grid_spec,
        compiler_params=pltpu.CompilerParams(
            # Layers are sequentially dependent and the output block is revisited,
            # so the (only) grid axis must be "arbitrary".
            dimension_semantics=("arbitrary",),
            vmem_limit_bytes=_vmem_limit_bytes(batch, fmax, out_dim),
        ),
        cost_estimate=cost,
    )(x, gamma, beta, w, bias)


def _reference_forward(x, params, eps=_EPS, slope=_SLOPE):
    """Pure-JAX reference (training-mode BN) on the unpadded parameter slices."""
    dims = params["dims"]
    n_layers = len(dims) - 1
    h = x.astype(jnp.float32)
    for i in range(n_layers):
        fin, fout = dims[i], dims[i + 1]
        gamma = params["gamma"][i, 0, :fin]
        beta = params["beta"][i, 0, :fin]
        w = params["w"][i, :fin, :fout].astype(jnp.float32)
        b = params["bias"][i, 0, :fout]
        mean = jnp.mean(h, axis=0, keepdims=True)
        var = jnp.mean((h - mean) ** 2, axis=0, keepdims=True)
        hn = (h - mean) * jax.lax.rsqrt(var + eps) * gamma + beta
        y = hn @ w + b
        if i < n_layers - 1:
            y = jnp.where(y > 0, y, slope * y)
        h = y
    return h


if __name__ == "__main__":
    # Small, module-consistent shapes.
    batch = 8
    in_dim = 32
    latent_dim = [64, 48]
    out_dim = 16

    key = jax.random.PRNGKey(0)
    key, kx = jax.random.split(key)
    x = jax.random.normal(kx, (batch, in_dim), jnp.float32)

    params = init_decoder_params(key, in_dim, latent_dim, out_dim)

    out = decoder_forward(x, params)
    out = jax.block_until_ready(out)
    assert out.shape == (batch, out_dim), out.shape

    ref = _reference_forward(x, params)
    max_err = float(jnp.max(jnp.abs(out - ref)))
    assert jnp.allclose(out, ref, rtol=2e-2, atol=2e-2), max_err

    print("KERNEL_OK")
</pallas_src>

<mosaic_0001>
module attributes {stable_mosaic.version = 11 : i64} {
  func.func @_decoder_kernel(%arg0: i32, %arg1: memref<8x128xf32, #tpu.memory_space<vmem>>, %arg2: memref<1x1x128xf32, #tpu.memory_space<vmem>>, %arg3: memref<1x1x128xf32, #tpu.memory_space<vmem>>, %arg4: memref<1x128x128xbf16, #tpu.memory_space<vmem>>, %arg5: memref<1x1x128xf32, #tpu.memory_space<vmem>>, %arg6: memref<8x16xf32, #tpu.memory_space<vmem>>, %arg7: memref<8x128xf32, #tpu.memory_space<vmem>>) attributes {dimension_semantics = [#tpu.dimension_semantics<arbitrary>], iteration_bounds = array<i64: 3>, scalar_prefetch = 0 : i64, scratch_operands = 1 : i64, tpu.core_type = #tpu.core_type<tc>, window_params = [{pipeline_mode = #tpu.pipeline_mode<synchronous>, transform_indices = @transform_0, window_bounds = array<i64: 8, 128>}, {transform_indices = @transform_1, window_bounds = array<i64: 1, 1, 128>}, {transform_indices = @transform_2, window_bounds = array<i64: 1, 1, 128>}, {transform_indices = @transform_3, window_bounds = array<i64: 1, 128, 128>}, {transform_indices = @transform_4, window_bounds = array<i64: 1, 1, 128>}, {pipeline_mode = #tpu.pipeline_mode<synchronous>, transform_indices = @transform_5, window_bounds = array<i64: 8, 16>}]} {
    %c0_i32 = arith.constant 0 : i32
    %0 = arith.cmpi eq, %arg0, %c0_i32 : i32
    %1 = arith.extui %0 : i1 to i32
    %c0_i32_0 = arith.constant 0 : i32
    %2 = arith.cmpi ne, %1, %c0_i32_0 : i32
    scf.if %2 {
      %c0_22 = arith.constant 0 : index
      %c0_23 = arith.constant 0 : index
      %43 = vector.load %arg1[%c0_22, %c0_23] : memref<8x128xf32, #tpu.memory_space<vmem>>, vector<8x128xf32>
      %c0_24 = arith.constant 0 : index
      %c0_25 = arith.constant 0 : index
      %44 = vector.load %arg7[%c0_24, %c0_25] : memref<8x128xf32, #tpu.memory_space<vmem>>, vector<8x128xf32>
      tpu.vector_store %arg7[%c0_24, %c0_25], %43 {strides = array<i32>} : memref<8x128xf32, #tpu.memory_space<vmem>>, vector<8x128xf32>,
    } else {
    }
    %c0 = arith.constant 0 : index
    %c0_1 = arith.constant 0 : index
    %3 = vector.load %arg7[%c0, %c0_1] : memref<8x128xf32, #tpu.memory_space<vmem>>, vector<8x128xf32>
    %c0_2 = arith.constant 0 : index
    %c0_3 = arith.constant 0 : index
    %c0_4 = arith.constant 0 : index
    %4 = vector.load %arg2[%c0_2, %c0_3, %c0_4] : memref<1x1x128xf32, #tpu.memory_space<vmem>>, vector<1x1x128xf32>
    %5 = vector.shape_cast %4 : vector<1x1x128xf32> to vector<1x128xf32>
    %c0_5 = arith.constant 0 : index
    %c0_6 = arith.constant 0 : index
    %c0_7 = arith.constant 0 : index
    %6 = vector.load %arg3[%c0_5, %c0_6, %c0_7] : memref<1x1x128xf32, #tpu.memory_space<vmem>>, vector<1x1x128xf32>
    %7 = vector.shape_cast %6 : vector<1x1x128xf32> to vector<1x128xf32>
    %c0_8 = arith.constant 0 : index
    %c0_9 = arith.constant 0 : index
    %c0_10 = arith.constant 0 : index
    %8 = vector.load %arg5[%c0_8, %c0_9, %c0_10] : memref<1x1x128xf32, #tpu.memory_space<vmem>>, vector<1x1x128xf32>
    %9 = vector.shape_cast %8 : vector<1x1x128xf32> to vector<1x128xf32>
    %cst = arith.constant dense<0.000000e+00> : vector<128xf32>
    %10 = vector.multi_reduction <add>, %3, %cst [0] : vector<8x128xf32> to vector<128xf32>
    %11 = vector.shape_cast %10 : vector<128xf32> to vector<1x128xf32>
    %cst_11 = arith.constant 8.000000e+00 : f32
    %12 = vector.broadcast %cst_11 : f32 to vector<1x128xf32>
    %13 = arith.divf %11, %12 : vector<1x128xf32>
    %14 = vector.broadcast %13 : vector<1x128xf32> to vector<8x128xf32>
    %15 = arith.subf %3, %14 : vector<8x128xf32>
    %16 = arith.mulf %15, %15 : vector<8x128xf32>
    %cst_12 = arith.constant dense<0.000000e+00> : vector<128xf32>
    %17 = vector.multi_reduction <add>, %16, %cst_12 [0] : vector<8x128xf32> to vector<128xf32>
    %18 = vector.shape_cast %17 : vector<128xf32> to vector<1x128xf32>
    %cst_13 = arith.constant 8.000000e+00 : f32
    %19 = vector.broadcast %cst_13 : f32 to vector<1x128xf32>
    %20 = arith.divf %18, %19 : vector<1x128xf32>
    %cst_14 = arith.constant 9.99999974E-6 : f32
    %21 = vector.broadcast %cst_14 : f32 to vector<1x128xf32>
    %22 = arith.addf %20, %21 : vector<1x128xf32>
    %23 = math.rsqrt %22 : vector<1x128xf32>
    %24 = arith.mulf %5, %23 : vector<1x128xf32>
    %25 = arith.mulf %13, %24 : vector<1x128xf32>
    %26 = arith.subf %7, %25 : vector<1x128xf32>
    %27 = vector.broadcast %24 : vector<1x128xf32> to vector<8x128xf32>
    %28 = arith.mulf %3, %27 : vector<8x128xf32>
    %29 = vector.broadcast %26 : vector<1x128xf32> to vector<8x128xf32>
    %30 = arith.addf %28, %29 : vector<8x128xf32>
    %31 = arith.truncf %30 : vector<8x128xf32> to vector<8x128xbf16>
    %c0_15 = arith.constant 0 : index
    %c0_16 = arith.constant 0 : index
    %c0_17 = arith.constant 0 : index
    %32 = vector.load %arg4[%c0_15, %c0_16, %c0_17] : memref<1x128x128xbf16, #tpu.memory_space<vmem>>, vector<1x128x128xbf16>
    %33 = vector.shape_cast %32 : vector<1x128x128xbf16> to vector<128x128xbf16>
    %cst_18 = arith.constant dense<0.000000e+00> : vector<8x128xf32>
    %34 = tpu.matmul %31, %33, %cst_18 {dimension_numbers = #tpu.dot_dimension_numbers<[1], [0], [0], [1], [0, 0, 1, 1], [], []>} : vector<8x128xbf16>, vector<128x128xbf16>, vector<8x128xf32> -> vector<8x128xf32>
    %35 = vector.broadcast %9 : vector<1x128xf32> to vector<8x128xf32>
    %36 = arith.addf %34, %35 : vector<8x128xf32>
    %c2_i32 = arith.constant 2 : i32
    %37 = arith.cmpi slt, %arg0, %c2_i32 : i32
    %38 = arith.extui %37 : i1 to i32
    %c0_i32_19 = arith.constant 0 : i32
    %39 = arith.cmpi ne, %38, %c0_i32_19 : i32
    scf.if %39 {
      %cst_22 = arith.constant 2.000000e-01 : f32
      %43 = vector.broadcast %cst_22 : f32 to vector<8x128xf32>
      %44 = arith.mulf %43, %36 : vector<8x128xf32>
      %45 = arith.maximumf %36, %44 : vector<8x128xf32>
      %c0_23 = arith.constant 0 : index
      %c0_24 = arith.constant 0 : index
      %46 = vector.load %arg7[%c0_23, %c0_24] : memref<8x128xf32, #tpu.memory_space<vmem>>, vector<8x128xf32>
      tpu.vector_store %arg7[%c0_23, %c0_24], %45 {strides = array<i32>} : memref<8x128xf32, #tpu.memory_space<vmem>>, vector<8x128xf32>,
    } else {
    }
    %c2_i32_20 = arith.constant 2 : i32
    %40 = arith.cmpi eq, %arg0, %c2_i32_20 : i32
    %41 = arith.extui %40 : i1 to i32
    %c0_i32_21 = arith.constant 0 : i32
    %42 = arith.cmpi ne, %41, %c0_i32_21 : i32
    scf.if %42 {
      %43 = vector.extract_strided_slice %36 {offsets = [0, 0], sizes = [8, 16], strides = [1, 1]} : vector<8x128xf32> to vector<8x16xf32>
      %c0_22 = arith.constant 0 : index
      %c0_23 = arith.constant 0 : index
      %44 = vector.load %arg6[%c0_22, %c0_23] : memref<8x16xf32, #tpu.memory_space<vmem>>, vector<8x16xf32>
      tpu.vector_store %arg6[%c0_22, %c0_23], %43 {strides = array<i32>} : memref<8x16xf32, #tpu.memory_space<vmem>>, vector<8x16xf32>,
    } else {
    }
    return
  }
  func.func @transform_0(%arg0: i32) -> (i32, i32) {
    %c0_i32 = arith.constant 0 : i32
    %c0_i32_0 = arith.constant 0 : i32
    %c0_i32_1 = arith.constant 0 : i32
    return %c0_i32, %c0_i32_0 : i32, i32
  }
  func.func @transform_1(%arg0: i32) -> (i32, i32, i32) {
    %c0_i32 = arith.constant 0 : i32
    %c0_i32_0 = arith.constant 0 : i32
    %c0_i32_1 = arith.constant 0 : i32
    return %arg0, %c0_i32, %c0_i32_0 : i32, i32, i32
  }
  func.func @transform_2(%arg0: i32) -> (i32, i32, i32) {
    %c0_i32 = arith.constant 0 : i32
    %c0_i32_0 = arith.constant 0 : i32
    %c0_i32_1 = arith.constant 0 : i32
    return %arg0, %c0_i32, %c0_i32_0 : i32, i32, i32
  }
  func.func @transform_3(%arg0: i32) -> (i32, i32, i32) {
    %c0_i32 = arith.constant 0 : i32
    %c0_i32_0 = arith.constant 0 : i32
    %c0_i32_1 = arith.constant 0 : i32
    return %arg0, %c0_i32, %c0_i32_0 : i32, i32, i32
  }
  func.func @transform_4(%arg0: i32) -> (i32, i32, i32) {
    %c0_i32 = arith.constant 0 : i32
    %c0_i32_0 = arith.constant 0 : i32
    %c0_i32_1 = arith.constant 0 : i32
    return %arg0, %c0_i32, %c0_i32_0 : i32, i32, i32
  }
  func.func @transform_5(%arg0: i32) -> (i32, i32) {
    %c0_i32 = arith.constant 0 : i32
    %c0_i32_0 = arith.constant 0 : i32
    %c0_i32_1 = arith.constant 0 : i32
    return %c0_i32, %c0_i32_0 : i32, i32
  }
}

</mosaic_0001>

<llo_original>
// kernel: tpu_custom_call.1
$region0: #{tpu_custom_call.1}
  #allocation0 [shape = 'u32[]', space=smem, size = 0x4, offset = 0x4, fixed_abs, tag = 'smem constant byte address 0x4 - core index']
  #allocation1 [shape = 'u32[144,128]{1,0:T(1,128)}', space=vmem, size = 0x12000, scoped, tag = 'internal scratch']
  #allocation2 [shape = 'f32[8,128]{1,0:T(8,128)}', space=vmem, size = 0x1000, scoped, tag = 'scratch operand']
  %s0 = inlined_call_operand.hbm [shape: f32[8,128], index: 0, kind: input, shape index: {}]
  %s1 = inlined_call_operand.vmem [shape: f32[3,1,128], index: 1, kind: input, shape index: {}]
  %s2 = inlined_call_operand.vmem [shape: f32[3,1,128], index: 2, kind: input, shape index: {}]
  %s3 = inlined_call_operand.hbm [shape: bf16[3,128,128], index: 3, kind: input, shape index: {}]
  %s4 = inlined_call_operand.vmem [shape: f32[3,1,128], index: 4, kind: input, shape index: {}]
  %s5 = inlined_call_operand.hbm [shape: f32[8,16], index: 5, kind: output, shape index: {}]
  %s6 = sld [smem:[#allocation0]]
  $region73: #{tpu_custom_call.1} parent=0
    _
  %s8 = ssub.s32 1, %s6
  %s9 = scalar_select 0, %s8, %s6
  $region1: #{tpu_custom_call.1} parent=0
    #allocation3 [shape = 'u8[4096]{0}', space=vmem, size = 0x1000, scoped, tag = 'input window, operand 0, single buffered']
    #allocation4 [shape = 's32[2]{0}', space=sflag, size = 0x8, scoped, tag = 'scoped memory for tpu_custom_call.1']
    #allocation5 [shape = 's32[2]{0}', space=sflag, size = 0x8, scoped, tag = 'scoped memory for tpu_custom_call.1']
    #allocation6 [shape = 'u8[65536]{0}', space=vmem, size = 0x10000, scoped, tag = 'input window, operand 3']
    #allocation7 [shape = 's32[2]{0}', space=sflag, size = 0x8, scoped, tag = 'scoped memory for tpu_custom_call.1']
    #allocation8 [shape = 'u8[4096]{0}', space=vmem, size = 0x1000, scoped, tag = 'output window, operand 0, single buffered']
    %10 = vsyncpa [#allocation4], 0
    %11 = vsyncpa [#allocation7], 0
    %s12 = scalar_lea.sflag [#allocation7], 1
    %13 = vsyncpa %s12, 0
    %14 = vsyncpa [#allocation5], 0
    loop: start=0, step=1, limit=5
    $region2: #{tpu_custom_call.1} parent=1 // loop_pre_header
      _
    $region3: #{tpu_custom_call.1} parent=1 // loop_header
      %s16 = sphi 0, %s20
      %p17 = scmp.ge.s32.totalorder %s16, 5
      %s24 = sphi 0, %s24
      %s26 = sphi 0, %s24
      %s27 = sphi 0, %s26
      %s41 = sphi 0, %s27
      %s47 = sphi 0, %s49
      %s50 = sphi 0, %s47
      %s51 = sphi 0, %s50
      %s67 = sphi 0, %s51
      %s73 = sphi 0, %s75
      %s76 = sphi 0, %s73
      %s77 = sphi 0, %s76
      %s93 = sphi 0, %s77
      %s99 = sphi 0, %s101
      %s102 = sphi 0, %s99
      %s103 = sphi 0, %s102
      %s119 = sphi 0, %s103
      %s125 = sphi 0, %s127
      %s128 = sphi 0, %s125
      %s129 = sphi 0, %s128
      %s145 = sphi 0, %s129
      %s149 = sphi 0, %s149
      %s151 = sphi 0, %s149
      %s152 = sphi 0, %s151
      %s166 = sphi 0, %s152
    $region4: #{tpu_custom_call.1} parent=1 // loop_header_branch
      %19 = sbr.rel (%p17) target = $region8
    $region5: #{tpu_custom_call.1} parent=1 // loop_body
      %s21 = ssub.s32 %s16, 1
      %s22 = ssub.s32 %s16, 2
      %s23 = sadd.s32 %s16, 1
      %s25 = sadd.s32 %s24, 1
      %p28 = scmp.eq.s32.totalorder %s16, 2
      %p29 = scmp.ne.s32.totalorder %s24, %s26
      %p30 = scmp.eq.s32.totalorder %s16, 0
      %p31 = por %p29, %p30
      %p32 = scmp.ne.s32.totalorder %s24, %s26
      %p33 = scmp.eq.s32.totalorder %s21, 2
      %p34 = por %p32, %p33
      %p35 = scmp.ne.s32.totalorder %s26, %s27
      %p36 = scmp.eq.s32.totalorder %s21, 0
      %p37 = por %p35, %p36
      %p38 = scmp.ne.s32.totalorder %s26, %s27
      %p39 = scmp.eq.s32.totalorder %s22, 2
      %p40 = por %p38, %p39
      %p42 = scmp.ne.s32.totalorder %s27, %s41
      %p43 = scmp.eq.s32.totalorder %s22, 0
      %p44 = por %p42, %p43
      %s45 = ssub.s32 %s16, %s23
      %p46 = scmp.eq.s32.totalorder %s45, 0
      %s48 = sadd.s32 %s47, 1
      %s49 = scalar_select %p46, %s47, %s48
      %p52 = pneg %p46
      %p53 = scmp.eq.s32.totalorder %s16, 2
      %p54 = por %p52, %p53
      %p55 = scmp.ne.s32.totalorder %s47, %s50
      %p56 = scmp.eq.s32.totalorder %s16, 0
      %p57 = por %p55, %p56
      %p58 = scmp.ne.s32.totalorder %s47, %s50
      %p59 = scmp.eq.s32.totalorder %s21, 2
      %p60 = por %p58, %p59
      %p61 = scmp.ne.s32.totalorder %s50, %s51
      %p62 = scmp.eq.s32.totalorder %s21, 0
      %p63 = por %p61, %p62
      %p64 = scmp.ne.s32.totalorder %s50, %s51
      %p65 = scmp.eq.s32.totalorder %s22, 2
      %p66 = por %p64, %p65
      %p68 = scmp.ne.s32.totalorder %s51, %s67
      %p69 = scmp.eq.s32.totalorder %s22, 0
      %p70 = por %p68, %p69
      %s71 = ssub.s32 %s16, %s23
      %p72 = scmp.eq.s32.totalorder %s71, 0
      %s74 = sadd.s32 %s73, 1
      %s75 = scalar_select %p72, %s73, %s74
      %p78 = pneg %p72
      %p79 = scmp.eq.s32.totalorder %s16, 2
      %p80 = por %p78, %p79
      %p81 = scmp.ne.s32.totalorder %s73, %s76
      %p82 = scmp.eq.s32.totalorder %s16, 0
      %p83 = por %p81, %p82
      %p84 = scmp.ne.s32.totalorder %s73, %s76
      %p85 = scmp.eq.s32.totalorder %s21, 2
      %p86 = por %p84, %p85
      %p87 = scmp.ne.s32.totalorder %s76, %s77
      %p88 = scmp.eq.s32.totalorder %s21, 0
      %p89 = por %p87, %p88
      %p90 = scmp.ne.s32.totalorder %s76, %s77
      %p91 = scmp.eq.s32.totalorder %s22, 2
      %p92 = por %p90, %p91
      %p94 = scmp.ne.s32.totalorder %s77, %s93
      %p95 = scmp.eq.s32.totalorder %s22, 0
      %p96 = por %p94, %p95
      %s97 = ssub.s32 %s16, %s23
      %p98 = scmp.eq.s32.totalorder %s97, 0
      %s100 = sadd.s32 %s99, 1
      %s101 = scalar_select %p98, %s99, %s100
      %p104 = pneg %p98
      %p105 = scmp.eq.s32.totalorder %s16, 2
      %p106 = por %p104, %p105
      %p107 = scmp.ne.s32.totalorder %s99, %s102
      %p108 = scmp.eq.s32.totalorder %s16, 0
      %p109 = por %p107, %p108
      %p110 = scmp.ne.s32.totalorder %s99, %s102
      %p111 = scmp.eq.s32.totalorder %s21, 2
      %p112 = por %p110, %p111
      %p113 = scmp.ne.s32.totalorder %s102, %s103
      %p114 = scmp.eq.s32.totalorder %s21, 0
      %p115 = por %p113, %p114
      %p116 = scmp.ne.s32.totalorder %s102, %s103
      %p117 = scmp.eq.s32.totalorder %s22, 2
      %p118 = por %p116, %p117
      %p120 = scmp.ne.s32.totalorder %s103, %s119
      %p121 = scmp.eq.s32.totalorder %s22, 0
      %p122 = por %p120, %p121
      %s123 = ssub.s32 %s16, %s23
      %p124 = scmp.eq.s32.totalorder %s123, 0
      %s126 = sadd.s32 %s125, 1
      %s127 = scalar_select %p124, %s125, %s126
      %p130 = pneg %p124
      %p131 = scmp.eq.s32.totalorder %s16, 2
      %p132 = por %p130, %p131
      %p133 = scmp.ne.s32.totalorder %s125, %s128
      %p134 = scmp.eq.s32.totalorder %s16, 0
      %p135 = por %p133, %p134
      %p136 = scmp.ne.s32.totalorder %s125, %s128
      %p137 = scmp.eq.s32.totalorder %s21, 2
      %p138 = por %p136, %p137
      %p139 = scmp.ne.s32.totalorder %s128, %s129
      %p140 = scmp.eq.s32.totalorder %s21, 0
      %p141 = por %p139, %p140
      %p142 = scmp.ne.s32.totalorder %s128, %s129
      %p143 = scmp.eq.s32.totalorder %s22, 2
      %p144 = por %p142, %p143
      %p146 = scmp.ne.s32.totalorder %s129, %s145
      %p147 = scmp.eq.s32.totalorder %s22, 0
      %p148 = por %p146, %p147
      %s150 = sadd.s32 %s149, 1
      %p153 = scmp.eq.s32.totalorder %s16, 2
      %p154 = scmp.ne.s32.totalorder %s149, %s151
      %p155 = scmp.eq.s32.totalorder %s16, 0
      %p156 = por %p154, %p155
      %p157 = scmp.ne.s32.totalorder %s149, %s151
      %p158 = scmp.eq.s32.totalorder %s21, 2
      %p159 = por %p157, %p158
      %p160 = scmp.ne.s32.totalorder %s151, %s152
      %p161 = scmp.eq.s32.totalorder %s21, 0
      %p162 = por %p160, %p161
      %p163 = scmp.ne.s32.totalorder %s151, %s152
      %p164 = scmp.eq.s32.totalorder %s22, 2
      %p165 = por %p163, %p164
      %p167 = scmp.ne.s32.totalorder %s152, %s166
      %p168 = scmp.eq.s32.totalorder %s22, 0
      %p169 = por %p167, %p168
      %p170 = scmp.le.s32.totalorder 1, %s16
      %p171 = scmp.lt.s32.totalorder %s16, 4
      %p172 = pnand %p170, %p171
      %p173 = pneg %p172
      // Predicated region
      $region9: #{tpu_custom_call.1} parent=5 // pred_check
        _
      $region10: #{tpu_custom_call.1} parent=5 // pred_check_branch
        %175 = sbr.rel (%p172) target = $region12
      $region11: #{tpu_custom_call.1} parent=5 // pred_region
        %s176 = ssub.s32 %s16, 1
        // Predicated region
        $region13: #{tpu_custom_call.1} parent=11 // pred_check
          %p177 = pneg %p37
        $region14: #{tpu_custom_call.1} parent=11 // pred_check_branch
          %179 = sbr.rel (%p177) target = $region16
        $region15: #{tpu_custom_call.1} parent=11 // pred_region
          %s181 = ssub.s32 128, 128
          %182 = vsyncadd [#allocation4], %s181
          %s184 = sshll.u32 [#allocation3], 4
          %s185 = int_to_ptr.vmem [resolvable:$true] %s184
          %187 = dma.hbm_to_vmem [thread:$0]  %s0, 128, %s185, [#allocation4]
        $region16: #{tpu_custom_call.1} parent=11 // pred_fallthru
          _
      $region12: #{tpu_custom_call.1} parent=5 // pred_fallthru
        _
      %p188 = scmp.lt.s32.totalorder %s16, 3
      // Predicated region
      $region17: #{tpu_custom_call.1} parent=5 // pred_check
        %p189 = pneg %p188
      $region18: #{tpu_custom_call.1} parent=5 // pred_check_branch
        %191 = sbr.rel (%p189) target = $region20
      $region19: #{tpu_custom_call.1} parent=5 // pred_region
        // Predicated region
        $region21: #{tpu_custom_call.1} parent=19 // pred_check
          %p192 = pneg %p57
        $region22: #{tpu_custom_call.1} parent=19 // pred_check_branch
          %194 = sbr.rel (%p192) target = $region24
        $region23: #{tpu_custom_call.1} parent=19 // pred_region
          %p195 = scmp.lt.s32.totalorder %s16, 2
          %s196 = scalar_select %p195, %s16, 2
          %s197 = scalar_lea.vmem %s1, %s196
        $region24: #{tpu_custom_call.1} parent=19 // pred_fallthru
          _
        // Predicated region
        $region25: #{tpu_custom_call.1} parent=19 // pred_check
          %p198 = pneg %p83
        $region26: #{tpu_custom_call.1} parent=19 // pred_check_branch
          %200 = sbr.rel (%p198) target = $region28
        $region27: #{tpu_custom_call.1} parent=19 // pred_region
          %p201 = scmp.lt.s32.totalorder %s16, 2
          %s202 = scalar_select %p201, %s16, 2
          %s203 = scalar_lea.vmem %s2, %s202
        $region28: #{tpu_custom_call.1} parent=19 // pred_fallthru
          _
        // Predicated region
        $region29: #{tpu_custom_call.1} parent=19 // pred_check
          %p204 = pneg %p109
        $region30: #{tpu_custom_call.1} parent=19 // pred_check_branch
          %206 = sbr.rel (%p204) target = $region32
        $region31: #{tpu_custom_call.1} parent=19 // pred_region
          %s207 = sand.u32 %s99, 1
          %s208 = scalar_lea.sflag [#allocation7], %s207
          %s209 = sand.u32 %s99, 1
          %s210 = smul.addr %s209, 64
          %s211 = scalar_lea.vmem [#allocation6], %s210
          %s213 = ssub.s32 1024, 1024
          %214 = vsyncadd %s208, %s213
          %s215 = smul.addr %s16, 16
          %s216 = smul.addr %s215, 64
          %s217 = scalar_lea.hbm %s3, %s216
          %s218 = sshll.u32 %s211, 4
          %s219 = int_to_ptr.vmem [resolvable:$true] %s218
          %224 = dma.hbm_to_vmem [thread:$0]  %s217, 1024, %s219, %s208, 64, 64, 4
        $region32: #{tpu_custom_call.1} parent=19 // pred_fallthru
          _
        // Predicated region
        $region33: #{tpu_custom_call.1} parent=19 // pred_check
          %p225 = pneg %p135
        $region34: #{tpu_custom_call.1} parent=19 // pred_check_branch
          %227 = sbr.rel (%p225) target = $region36
        $region35: #{tpu_custom_call.1} parent=19 // pred_region
          %p228 = scmp.lt.s32.totalorder %s16, 2
          %s229 = scalar_select %p228, %s16, 2
          %s230 = scalar_lea.vmem %s4, %s229
        $region36: #{tpu_custom_call.1} parent=19 // pred_fallthru
          _
      $region20: #{tpu_custom_call.1} parent=5 // pred_fallthru
        _
      %p231 = scmp.le.s32.totalorder 1, %s16
      %p232 = scmp.lt.s32.totalorder %s16, 4
      %p233 = pnand %p231, %p232
      %p234 = pneg %p233
      // Predicated region
      $region37: #{tpu_custom_call.1} parent=5 // pred_check
        _
      $region38: #{tpu_custom_call.1} parent=5 // pred_check_branch
        %236 = sbr.rel (%p233) target = $region40
      $region39: #{tpu_custom_call.1} parent=5 // pred_region
        %s237 = ssub.s32 %s16, 1
        // Predicated region
        $region41: #{tpu_custom_call.1} parent=39 // pred_check
          %p238 = pneg %p37
        $region42: #{tpu_custom_call.1} parent=39 // pred_check_branch
          %240 = sbr.rel (%p238) target = $region44
        $region43: #{tpu_custom_call.1} parent=39 // pred_region
          %241 = dma.done [#allocation4], 128
        $region44: #{tpu_custom_call.1} parent=39 // pred_fallthru
          _
        %s242 = sand.u32 %s102, 1
        %s243 = scalar_lea.sflag [#allocation7], %s242
        %s244 = sand.u32 %s102, 1
        %s245 = smul.addr %s244, 64
        %s246 = scalar_lea.vmem [#allocation6], %s245
        // Predicated region
        $region45: #{tpu_custom_call.1} parent=39 // pred_check
          %p247 = pneg %p115
        $region46: #{tpu_custom_call.1} parent=39 // pred_check_branch
          %249 = sbr.rel (%p247) target = $region48
        $region47: #{tpu_custom_call.1} parent=39 // pred_region
          %250 = dma.done %s243, 1024
        $region48: #{tpu_custom_call.1} parent=39 // pred_fallthru
          _
        %p251 = pneg %p37
        %p252 = pneg %p34
        %p253 = scmp.lt.s32.totalorder %s21, 2
        %s254 = scalar_select %p253, %s21, 2
        %s255 = scalar_lea.vmem %s1, %s254
        %p256 = pneg %p63
        %p257 = pneg %p60
        %p258 = scmp.lt.s32.totalorder %s21, 2
        %s259 = scalar_select %p258, %s21, 2
        %s260 = scalar_lea.vmem %s2, %s259
        %p261 = pneg %p89
        %p262 = pneg %p86
        %s263 = sand.u32 %s102, 1
        %s264 = scalar_lea.sflag [#allocation7], %s263
        %s265 = sand.u32 %s102, 1
        %s266 = smul.addr %s265, 64
        %s267 = scalar_lea.vmem [#allocation6], %s266
        %p268 = pneg %p115
        %p269 = pneg %p112
        %p270 = scmp.lt.s32.totalorder %s21, 2
        %s271 = scalar_select %p270, %s21, 2
        %s272 = scalar_lea.vmem %s4, %s271
        %p273 = pneg %p141
        %p274 = pneg %p138
        %p275 = pneg %p162
        %p276 = pneg %p159
        %p277 = scmp.lt.s32.totalorder %s21, 2
        %s278 = scalar_select %p277, %s21, 2
        %s279 = scalar_lea.vmem %s1, %s278
        %p280 = scmp.lt.s32.totalorder %s21, 2
        %s281 = scalar_select %p280, %s21, 2
        %s282 = scalar_lea.vmem %s2, %s281
        %p283 = scmp.lt.s32.totalorder %s21, 2
        %s284 = scalar_select %p283, %s21, 2
        %s285 = scalar_lea.vmem %s4, %s284
        %p287 = scmp.eq.s32.totalorder %s21, 0
        // Predicated region
        $region49: #{tpu_custom_call.1} parent=39 // pred_check
          %p288 = pneg %p287
        $region50: #{tpu_custom_call.1} parent=39 // pred_check_branch
          %290 = sbr.rel (%p288) target = $region52
        $region51: #{tpu_custom_call.1} parent=39 // pred_region
          %v291 = vld [vmem:[#allocation3] sm:$0xff]
          %292 = vst [vmem:[#allocation2] sm:$0xff] %v291
        $region52: #{tpu_custom_call.1} parent=39 // pred_fallthru
          _
        %v293 = vld [vmem:[#allocation2] sm:$0xff]
        %v294 = vld [vmem:[%s279] sm:$0x1]
        %v295 = vld [vmem:[%s282] sm:$0x1]
        %v296 = vld [vmem:[%s285] sm:$0x1]
        %v297 = vrot.slane %v293, 4
        %v298 = vadd.f32 %v293, %v297
        %v299 = vrot.slane %v298, 2
        %v300 = vadd.f32 %v298, %v299
        %v301 = vrot.slane %v300, 1
        %v302 = vadd.f32 %v300, %v301
        %v303 = vrcp.pop 8.0
        %v304 = vmul.f32 %v302, %v303
        %v305 = vsub.f32 %v293, %v304
        %v306 = vmul.f32 %v305, %v305
        %v307 = vrot.slane %v306, 4
        %v308 = vadd.f32 %v306, %v307
        %v309 = vrot.slane %v308, 2
        %v310 = vadd.f32 %v308, %v309
        %v311 = vrot.slane %v310, 1
        %v312 = vadd.f32 %v310, %v311
        %v313 = vmul.f32 %v312, %v303
        %v314 = vadd.f32 %v313, 1e-05
        %v315 = vrsqrt.pop %v314
        %v316 = vmul.f32 %v294, %v315
        %v317 = vmul.f32 %v304, %v316
        %v318 = vsub.f32 %v295, %v317
        %v320 = vlaneseq
        %v321 = vshrl.u32 %v320, 7
        %v322 = vsub.s32 0, %v321
        %v323 = vrot.slane %v316, %v322
        %v325 = vmul.f32 %v293, %v323
        %v327 = vlaneseq
        %v328 = vshrl.u32 %v327, 7
        %v329 = vsub.s32 0, %v328
        %v330 = vrot.slane %v318, %v329
        %v332 = vadd.f32 %v325, %v330
        %v333 = vpack.c.bf16 %v332, %v332
        %v334 = vld [vmem:[%s246] sm:$0xf]
        %v335 = vld [vmem:[%s246 + $0x4] sm:$0xf]
        %v336 = vld [vmem:[%s246 + $0x8] sm:$0xf]
        %v337 = vld [vmem:[%s246 + $0xc] sm:$0xf]
        %v338 = vld [vmem:[%s246 + $0x10] sm:$0xf]
        %v339 = vld [vmem:[%s246 + $0x14] sm:$0xf]
        %v340 = vld [vmem:[%s246 + $0x18] sm:$0xf]
        %v341 = vld [vmem:[%s246 + $0x1c] sm:$0xf]
        %v342 = vld [vmem:[%s246 + $0x20] sm:$0xf]
        %v343 = vld [vmem:[%s246 + $0x24] sm:$0xf]
        %v344 = vld [vmem:[%s246 + $0x28] sm:$0xf]
        %v345 = vld [vmem:[%s246 + $0x2c] sm:$0xf]
        %v346 = vld [vmem:[%s246 + $0x30] sm:$0xf]
        %v347 = vld [vmem:[%s246 + $0x34] sm:$0xf]
        %v348 = vld [vmem:[%s246 + $0x38] sm:$0xf]
        %v349 = vld [vmem:[%s246 + $0x3c] sm:$0xf]
        %v351 = vlaneseq
        %v352 = vshrl.u32 %v351, 7
        %v353 = vsub.s32 0, %v352
        %v354 = vrot.slane %v296, %v353
        %v372 = vunpack.c.l.b16 %v334
        %v373 = vunpack.c.l.b16 %v335
        %v374 = vunpack.c.l.b16 %v336
        %v375 = vunpack.c.l.b16 %v337
        %v376 = vunpack.c.l.b16 %v338
        %v377 = vunpack.c.l.b16 %v339
        %v378 = vunpack.c.l.b16 %v340
        %v379 = vunpack.c.l.b16 %v341
        %v380 = vunpack.c.l.b16 %v342
        %v381 = vunpack.c.l.b16 %v343
        %v382 = vunpack.c.l.b16 %v344
        %v383 = vunpack.c.l.b16 %v345
        %v384 = vunpack.c.l.b16 %v346
        %v385 = vunpack.c.l.b16 %v347
        %v386 = vunpack.c.l.b16 %v348
        %v387 = vunpack.c.l.b16 %v349
        %v388 = vpack.c.b16 %v373, %v372
        %v389 = vpack.c.b16 %v375, %v374
        %v390 = vpack.c.b16 %v377, %v376
        %v391 = vpack.c.b16 %v379, %v378
        %v392 = vpack.c.b16 %v381, %v380
        %v393 = vpack.c.b16 %v383, %v382
        %v394 = vpack.c.b16 %v385, %v384
        %v395 = vpack.c.b16 %v387, %v386
        %404 = vmatprep.subr.bf16.mxu0 0
        %405 = vmatpush1.bf16.msra.mxu0 %v388
        %406 = vmatprep.subr.bf16.mxu0 0
        %407 = vmatpush1.bf16.msra.mxu0 %v389
        %408 = vmatprep.subr.bf16.mxu0 0
        %409 = vmatpush1.bf16.msra.mxu0 %v390
        %410 = vmatprep.subr.bf16.mxu0 0
        %411 = vmatpush1.bf16.msra.mxu0 %v391
        %412 = vmatprep.subr.bf16.mxu0 0
        %413 = vmatpush1.bf16.msra.mxu0 %v392
        %414 = vmatprep.subr.bf16.mxu0 0
        %415 = vmatpush1.bf16.msra.mxu0 %v393
        %416 = vmatprep.subr.bf16.mxu0 0
        %417 = vmatpush1.bf16.msra.mxu0 %v394
        %418 = vmatprep.subr.bf16.mxu0 0
        %419 = vmatpush1.bf16.msra.mxu0 %v395
        %420 = vmatprep.subr.bf16.mxu0 0
        %421 = vmatpush1.bf16.msra.mxu0 0
        %422 = vmatprep.subr.bf16.mxu0 0
        %423 = vmatpush1.bf16.msra.mxu0 0
        %424 = vmatprep.subr.bf16.mxu0 0
        %425 = vmatpush1.bf16.msra.mxu0 0
        %426 = vmatprep.subr.bf16.mxu0 0
        %427 = vmatpush1.bf16.msra.mxu0 0
        %428 = vmatprep.subr.bf16.mxu0 0
        %429 = vmatpush1.bf16.msra.mxu0 0
        %430 = vmatprep.subr.bf16.mxu0 0
        %431 = vmatpush1.bf16.msra.mxu0 0
        %432 = vmatprep.subr.bf16.mxu0 0
        %433 = vmatpush1.bf16.msra.mxu0 0
        %434 = vmatprep.subr.bf16.mxu0 0
        %435 = vmatpush1.bf16.msra.mxu0 0
        %436 = vmatprep.mubr.bf16.mxu0 0
        %437 = vmatmul.mubr.bf16.gmra.mrb[0].mxu0 %v333
        %v438 = vpop.f32.mrb[0].mxu0
        %v439 = vadd.f32 %v354, %v438
        %v440 = vpop.f32.mrb[0].mxu0
        %v441 = vpop.f32.mrb[0].mxu0
        %v442 = vpop.f32.mrb[0].mxu0
        %443 = vdwg.mxu0
        %p444 = scmp.lt.s32.totalorder %s21, 2
        // Predicated region
        $region53: #{tpu_custom_call.1} parent=39 // pred_check
          %p445 = pneg %p444
        $region54: #{tpu_custom_call.1} parent=39 // pred_check_branch
          %447 = sbr.rel (%p445) target = $region56
        $region55: #{tpu_custom_call.1} parent=39 // pred_region
          %v448 = vmul.f32 %v439, 0.2
          %v449 = vmax.f32 %v439, %v448
          %450 = vst [vmem:[#allocation2] sm:$0xff] %v449
        $region56: #{tpu_custom_call.1} parent=39 // pred_fallthru
          _
        %p451 = scmp.eq.s32.totalorder %s21, 2
        // Predicated region
        $region57: #{tpu_custom_call.1} parent=39 // pred_check
          %p452 = pneg %p451
        $region58: #{tpu_custom_call.1} parent=39 // pred_check_branch
          %454 = sbr.rel (%p452) target = $region60
        $region59: #{tpu_custom_call.1} parent=39 // pred_region
          %vm455 = vcmask 130048
          %456 = vst.msk [vmem:[#allocation8] sm:$0xff] %vm455, %v439
        $region60: #{tpu_custom_call.1} parent=39 // pred_fallthru
          _
        // Predicated region
        $region61: #{tpu_custom_call.1} parent=39 // pred_check
          %p457 = pneg %p159
        $region62: #{tpu_custom_call.1} parent=39 // pred_check_branch
          %459 = sbr.rel (%p457) target = $region64
        $region63: #{tpu_custom_call.1} parent=39 // pred_region
          %s461 = ssub.s32 128, 128
          %462 = vsyncadd [#allocation5], %s461
          %s464 = sshll.u32 [#allocation8], 4
          %s465 = int_to_ptr.vmem [resolvable:$true] %s464
          %467 = dma.vmem_to_hbm [thread:$0]  %s465, 128, %s5, [#allocation5]
        $region64: #{tpu_custom_call.1} parent=39 // pred_fallthru
          _
        // Predicated region
        $region65: #{tpu_custom_call.1} parent=39 // pred_check
          %p468 = pneg %p159
        $region66: #{tpu_custom_call.1} parent=39 // pred_check_branch
          %470 = sbr.rel (%p468) target = $region68
        $region67: #{tpu_custom_call.1} parent=39 // pred_region
          %471 = dma.done [#allocation5], 128
        $region68: #{tpu_custom_call.1} parent=39 // pred_fallthru
          _
      $region40: #{tpu_custom_call.1} parent=5 // pred_fallthru
        _
      %p472 = scmp.le.s32.totalorder 2, %s16
      // Predicated region
      $region69: #{tpu_custom_call.1} parent=5 // pred_check
        %p473 = pneg %p472
      $region70: #{tpu_custom_call.1} parent=5 // pred_check_branch
        %475 = sbr.rel (%p473) target = $region72
      $region71: #{tpu_custom_call.1} parent=5 // pred_region
        %s476 = ssub.s32 %s16, 2
      $region72: #{tpu_custom_call.1} parent=5 // pred_fallthru
        _
    $region6: #{tpu_custom_call.1} parent=1 // loop_footer
      %s20 = sadd.s32 1, %s16
    $region7: #{tpu_custom_call.1} parent=1 // loop_footer_branch
      %15 = sbr.rel target = $region3
    $region8: #{tpu_custom_call.1} parent=1 // loop_exit
      _
    %477 = vsyncpa [#allocation4], 1
    %s478 = scalar_lea.sflag [#allocation4], 1
    %479 = vsyncpa %s478, 1
    %480 = vsyncpa [#allocation7], 1
    %s481 = scalar_lea.sflag [#allocation7], 1
    %482 = vsyncpa %s481, 1
    %483 = vsyncpa [#allocation5], 1
    %s484 = scalar_lea.sflag [#allocation5], 1
    %485 = vsyncpa %s484, 1

</llo_original>
